<compile_context>
chip_gen: v7x
topology: tpu7x:2x2x1
jax: 0.10.0
libtpu: 0.0.40
codegen_flags: <defaults>
</compile_context>

<pallas_src>
import functools

import jax
import jax.numpy as jnp
from jax import lax
from jax.experimental import pallas as pl
from jax.experimental.pallas import tpu as pltpu


def _self_attention_kernel(x_ref, w_ref, b_ref, o_ref, *, batch, seq, dp):
    # x_ref: (B*S, In); w_ref: (In, 3*dp); b_ref: (1, 3*dp); o_ref: (B*S, dp)
    x = x_ref[...]

    # Fused Q/K/V projection: a single wide MXU matmul (N = 3*dp dense lanes).
    qkv = jnp.dot(x, w_ref[...], preferred_element_type=jnp.float32) + b_ref[...]

    # vreg-aligned 128-lane slices; lanes >= D are exactly zero by construction.
    q = qkv[:, 0:dp]            # already scaled by 1/sqrt(D) via the fused weight
    k = qkv[:, dp:2 * dp]
    v = qkv[:, 2 * dp:3 * dp]

    # Attention per batch element; B is tiny, so unroll at trace time (static slices,
    # sublane-aligned offsets: seq is a multiple of 8).
    for b in range(batch):
        lo = b * seq
        qb = q[lo:lo + seq, :]
        kb = k[lo:lo + seq, :]
        vb = v[lo:lo + seq, :]

        # scores = qb @ kb^T, contracting last dims of both (no transpose materialized).
        s = lax.dot_general(
            qb, kb,
            dimension_numbers=(((1,), (1,)), ((), ())),
            preferred_element_type=jnp.float32)                      # (S, S)

        # Numerically stable softmax; reciprocal goes to the EUP slot (off the VALU path).
        m = jnp.max(s, axis=-1, keepdims=True)
        e = jnp.exp(s - m)
        attn = e * pl.reciprocal(jnp.sum(e, axis=-1, keepdims=True), approx=True)

        # Weighted sum; store is lane-dense (dp is a multiple of 128) and unmasked.
        o_ref[lo:lo + seq, :] = jnp.dot(
            attn, vb, preferred_element_type=jnp.float32).astype(o_ref.dtype)


def self_attention(x, wq, wk, wv, bq, bk, bv):
    """x: (B, S, In); w*: (In, D); b*: (1, D) or (D,).  Returns (B, S, D) float32."""
    B, S, In = x.shape
    D = wq.shape[1]
    DP = pl.cdiv(D, 128) * 128          # lane-pad each of Q/K/V to a multiple of 128
    scale = 1.0 / jnp.sqrt(jnp.float32(D))

    def pad_w(w):                        # (In, D) -> (In, DP)
        return jnp.pad(w.astype(jnp.float32), ((0, 0), (0, DP - D)))

    def pad_b(b):                        # (1, D) or (D,) -> (1, DP)
        return jnp.pad(b.astype(jnp.float32).reshape(1, D), ((0, 0), (0, DP - D)))

    # Fused, padded, pre-scaled parameters: [Q*scale | K | V], each block DP lanes wide.
    w_fused = jnp.concatenate([pad_w(wq * scale), pad_w(wk), pad_w(wv)], axis=1)  # (In, 3*DP)
    b_fused = jnp.concatenate([pad_b(bq * scale), pad_b(bk), pad_b(bv)], axis=1)  # (1, 3*DP)

    x2 = x.reshape(B * S, In).astype(jnp.float32)

    kernel = functools.partial(_self_attention_kernel, batch=B, seq=S, dp=DP)

    flops = 2 * B * S * In * 3 * DP + 2 * 2 * B * S * S * DP   # qkv proj + scores + out
    bytes_accessed = 4 * (B * S * In + In * 3 * DP + 3 * DP + B * S * DP)

    out = pl.pallas_call(
        kernel,
        out_shape=jax.ShapeDtypeStruct((B * S, DP), jnp.float32),
        grid=(1,),                       # single step: per-step overhead dominates at this size
        in_specs=[
            pl.BlockSpec((B * S, In), lambda i: (0, 0)),      # x (flattened batch*seq)
            pl.BlockSpec((In, 3 * DP), lambda i: (0, 0)),     # fused/padded W_qkv
            pl.BlockSpec((1, 3 * DP), lambda i: (0, 0)),      # fused/padded b_qkv
        ],
        out_specs=pl.BlockSpec((B * S, DP), lambda i: (0, 0)),
        compiler_params=pltpu.CompilerParams(
            dimension_semantics=("arbitrary",)),
        cost_estimate=pl.CostEstimate(
            flops=flops,
            transcendentals=B * S * S,
            bytes_accessed=bytes_accessed),
    )(x2, w_fused, b_fused)

    # Drop lane padding and restore (B, S, D).
    return out[:, :D].reshape(B, S, D)


def _reference(x, wq, wk, wv, bq, bk, bv):
    q = x @ wq + bq
    k = x @ wk + bk
    v = x @ wv + bv
    scores = jnp.einsum("bqd,bkd->bqk", q, k) / jnp.sqrt(jnp.float32(wq.shape[1]))
    attn = jax.nn.softmax(scores, axis=-1)
    return jnp.einsum("bqk,bkd->bqd", attn, v)


if __name__ == "__main__":
    # Small shapes consistent with the module's forward: (B, S, input_size)
    B, S, INPUT_SIZE, OUTPUT_SIZE = 2, 8, 32, 32

    key = jax.random.PRNGKey(0)
    kx, kq, kk, kv, kbq, kbk, kbv = jax.random.split(key, 7)

    x = jax.random.normal(kx, (B, S, INPUT_SIZE), dtype=jnp.float32)

    # Deterministic parameter init mimicking torch.nn.Linear's uniform(-1/sqrt(in), 1/sqrt(in))
    bound = 1.0 / jnp.sqrt(jnp.float32(INPUT_SIZE))
    wq = jax.random.uniform(kq, (INPUT_SIZE, OUTPUT_SIZE), jnp.float32, -bound, bound)
    wk = jax.random.uniform(kk, (INPUT_SIZE, OUTPUT_SIZE), jnp.float32, -bound, bound)
    wv = jax.random.uniform(kv, (INPUT_SIZE, OUTPUT_SIZE), jnp.float32, -bound, bound)
    bq = jax.random.uniform(kbq, (1, OUTPUT_SIZE), jnp.float32, -bound, bound)
    bk = jax.random.uniform(kbk, (1, OUTPUT_SIZE), jnp.float32, -bound, bound)
    bv = jax.random.uniform(kbv, (1, OUTPUT_SIZE), jnp.float32, -bound, bound)

    out = self_attention(x, wq, wk, wv, bq, bk, bv)
    out = jax.block_until_ready(out)

    ref = _reference(x, wq, wk, wv, bq, bk, bv)
    assert out.shape == (B, S, OUTPUT_SIZE)
    # Tolerance accounts for the approximate (EUP) reciprocal in the softmax denominator.
    assert jnp.allclose(out, ref, atol=2e-3, rtol=2e-3), "mismatch vs JAX reference"

    print("KERNEL_OK")
</pallas_src>

<mosaic_0001>
module attributes {stable_mosaic.version = 11 : i64} {
  func.func @_self_attention_kernel(%arg0: i32, %arg1: memref<16x32xf32, #tpu.memory_space<vmem>>, %arg2: memref<32x384xf32, #tpu.memory_space<vmem>>, %arg3: memref<1x384xf32, #tpu.memory_space<vmem>>, %arg4: memref<16x128xf32, #tpu.memory_space<vmem>>) attributes {dimension_semantics = [#tpu.dimension_semantics<arbitrary>], iteration_bounds = array<i64: 1>, scalar_prefetch = 0 : i64, scratch_operands = 0 : i64, tpu.core_type = #tpu.core_type<tc>, window_params = [{pipeline_mode = #tpu.pipeline_mode<synchronous>, transform_indices = @transform_0, window_bounds = array<i64: 16, 32>}, {pipeline_mode = #tpu.pipeline_mode<synchronous>, transform_indices = @transform_1, window_bounds = array<i64: 32, 384>}, {pipeline_mode = #tpu.pipeline_mode<synchronous>, transform_indices = @transform_2, window_bounds = array<i64: 1, 384>}, {pipeline_mode = #tpu.pipeline_mode<synchronous>, transform_indices = @transform_3, window_bounds = array<i64: 16, 128>}]} {
    %c0 = arith.constant 0 : index
    %c0_0 = arith.constant 0 : index
    %0 = vector.load %arg1[%c0, %c0_0] : memref<16x32xf32, #tpu.memory_space<vmem>>, vector<16x32xf32>
    %c0_1 = arith.constant 0 : index
    %c0_2 = arith.constant 0 : index
    %1 = vector.load %arg2[%c0_1, %c0_2] : memref<32x384xf32, #tpu.memory_space<vmem>>, vector<32x384xf32>
    %cst = arith.constant dense<0.000000e+00> : vector<16x384xf32>
    %2 = tpu.matmul %0, %1, %cst {dimension_numbers = #tpu.dot_dimension_numbers<[1], [0], [0], [1], [0, 0, 1, 1], [], []>} : vector<16x32xf32>, vector<32x384xf32>, vector<16x384xf32> -> vector<16x384xf32>
    %c0_3 = arith.constant 0 : index
    %c0_4 = arith.constant 0 : index
    %3 = vector.load %arg3[%c0_3, %c0_4] : memref<1x384xf32, #tpu.memory_space<vmem>>, vector<1x384xf32>
    %4 = vector.broadcast %3 : vector<1x384xf32> to vector<16x384xf32>
    %5 = arith.addf %2, %4 : vector<16x384xf32>
    %6 = vector.extract_strided_slice %5 {offsets = [0, 0], sizes = [16, 128], strides = [1, 1]} : vector<16x384xf32> to vector<16x128xf32>
    %7 = vector.extract_strided_slice %5 {offsets = [0, 128], sizes = [16, 128], strides = [1, 1]} : vector<16x384xf32> to vector<16x128xf32>
    %8 = vector.extract_strided_slice %5 {offsets = [0, 256], sizes = [16, 128], strides = [1, 1]} : vector<16x384xf32> to vector<16x128xf32>
    %9 = vector.extract_strided_slice %6 {offsets = [0, 0], sizes = [8, 128], strides = [1, 1]} : vector<16x128xf32> to vector<8x128xf32>
    %10 = vector.extract_strided_slice %7 {offsets = [0, 0], sizes = [8, 128], strides = [1, 1]} : vector<16x128xf32> to vector<8x128xf32>
    %11 = vector.extract_strided_slice %8 {offsets = [0, 0], sizes = [8, 128], strides = [1, 1]} : vector<16x128xf32> to vector<8x128xf32>
    %cst_5 = arith.constant dense<0.000000e+00> : vector<8x8xf32>
    %12 = tpu.matmul %9, %10, %cst_5 {dimension_numbers = #tpu.dot_dimension_numbers<[1], [1], [0], [0], [0, 0, 1, 0], [], []>} : vector<8x128xf32>, vector<8x128xf32>, vector<8x8xf32> -> vector<8x8xf32>
    %cst_6 = arith.constant dense<0xFF800000> : vector<8xf32>
    %13 = vector.multi_reduction <maximumf>, %12, %cst_6 [1] : vector<8x8xf32> to vector<8xf32>
    %14 = vector.shape_cast %13 : vector<8xf32> to vector<8x1xf32>
    %15 = vector.broadcast %14 : vector<8x1xf32> to vector<8x8xf32>
    %16 = arith.subf %12, %15 : vector<8x8xf32>
    %17 = math.exp %16 : vector<8x8xf32>
    %cst_7 = arith.constant dense<0.000000e+00> : vector<8xf32>
    %18 = vector.multi_reduction <add>, %17, %cst_7 [1] : vector<8x8xf32> to vector<8xf32>
    %19 = vector.shape_cast %18 : vector<8xf32> to vector<8x1xf32>
    %20 = tpu.reciprocal %19 {approx = true} : vector<8x1xf32> -> vector<8x1xf32>
    %21 = vector.broadcast %20 : vector<8x1xf32> to vector<8x8xf32>
    %22 = arith.mulf %17, %21 : vector<8x8xf32>
    %cst_8 = arith.constant dense<0.000000e+00> : vector<8x128xf32>
    %23 = tpu.matmul %22, %11, %cst_8 {dimension_numbers = #tpu.dot_dimension_numbers<[1], [0], [0], [1], [0, 0, 1, 1], [], []>} : vector<8x8xf32>, vector<8x128xf32>, vector<8x128xf32> -> vector<8x128xf32>
    %c0_9 = arith.constant 0 : index
    %c0_10 = arith.constant 0 : index
    %24 = vector.load %arg4[%c0_9, %c0_10] : memref<16x128xf32, #tpu.memory_space<vmem>>, vector<8x128xf32>
    tpu.vector_store %arg4[%c0_9, %c0_10], %23 {strides = array<i32>} : memref<16x128xf32, #tpu.memory_space<vmem>>, vector<8x128xf32>,
    %25 = vector.extract_strided_slice %6 {offsets = [8, 0], sizes = [8, 128], strides = [1, 1]} : vector<16x128xf32> to vector<8x128xf32>
    %26 = vector.extract_strided_slice %7 {offsets = [8, 0], sizes = [8, 128], strides = [1, 1]} : vector<16x128xf32> to vector<8x128xf32>
    %27 = vector.extract_strided_slice %8 {offsets = [8, 0], sizes = [8, 128], strides = [1, 1]} : vector<16x128xf32> to vector<8x128xf32>
    %cst_11 = arith.constant dense<0.000000e+00> : vector<8x8xf32>
    %28 = tpu.matmul %25, %26, %cst_11 {dimension_numbers = #tpu.dot_dimension_numbers<[1], [1], [0], [0], [0, 0, 1, 0], [], []>} : vector<8x128xf32>, vector<8x128xf32>, vector<8x8xf32> -> vector<8x8xf32>
    %cst_12 = arith.constant dense<0xFF800000> : vector<8xf32>
    %29 = vector.multi_reduction <maximumf>, %28, %cst_12 [1] : vector<8x8xf32> to vector<8xf32>
    %30 = vector.shape_cast %29 : vector<8xf32> to vector<8x1xf32>
    %31 = vector.broadcast %30 : vector<8x1xf32> to vector<8x8xf32>
    %32 = arith.subf %28, %31 : vector<8x8xf32>
    %33 = math.exp %32 : vector<8x8xf32>
    %cst_13 = arith.constant dense<0.000000e+00> : vector<8xf32>
    %34 = vector.multi_reduction <add>, %33, %cst_13 [1] : vector<8x8xf32> to vector<8xf32>
    %35 = vector.shape_cast %34 : vector<8xf32> to vector<8x1xf32>
    %36 = tpu.reciprocal %35 {approx = true} : vector<8x1xf32> -> vector<8x1xf32>
    %37 = vector.broadcast %36 : vector<8x1xf32> to vector<8x8xf32>
    %38 = arith.mulf %33, %37 : vector<8x8xf32>
    %cst_14 = arith.constant dense<0.000000e+00> : vector<8x128xf32>
    %39 = tpu.matmul %38, %27, %cst_14 {dimension_numbers = #tpu.dot_dimension_numbers<[1], [0], [0], [1], [0, 0, 1, 1], [], []>} : vector<8x8xf32>, vector<8x128xf32>, vector<8x128xf32> -> vector<8x128xf32>
    %c8 = arith.constant 8 : index
    %c0_15 = arith.constant 0 : index
    %40 = vector.load %arg4[%c8, %c0_15] : memref<16x128xf32, #tpu.memory_space<vmem>>, vector<8x128xf32>
    tpu.vector_store %arg4[%c8, %c0_15], %39 {strides = array<i32>} : memref<16x128xf32, #tpu.memory_space<vmem>>, vector<8x128xf32>,
    return
  }
  func.func @transform_0(%arg0: i32) -> (i32, i32) {
    %c0_i32 = arith.constant 0 : i32
    %c0_i32_0 = arith.constant 0 : i32
    %c0_i32_1 = arith.constant 0 : i32
    return %c0_i32, %c0_i32_0 : i32, i32
  }
  func.func @transform_1(%arg0: i32) -> (i32, i32) {
    %c0_i32 = arith.constant 0 : i32
    %c0_i32_0 = arith.constant 0 : i32
    %c0_i32_1 = arith.constant 0 : i32
    return %c0_i32, %c0_i32_0 : i32, i32
  }
  func.func @transform_2(%arg0: i32) -> (i32, i32) {
    %c0_i32 = arith.constant 0 : i32
    %c0_i32_0 = arith.constant 0 : i32
    %c0_i32_1 = arith.constant 0 : i32
    return %c0_i32, %c0_i32_0 : i32, i32
  }
  func.func @transform_3(%arg0: i32) -> (i32, i32) {
    %c0_i32 = arith.constant 0 : i32
    %c0_i32_0 = arith.constant 0 : i32
    %c0_i32_1 = arith.constant 0 : i32
    return %c0_i32, %c0_i32_0 : i32, i32
  }
}

</mosaic_0001>

<llo_original>
// kernel: tpu_custom_call.1
$region0: #{tpu_custom_call.1}
  #allocation0 [shape = 'u32[]', space=smem, size = 0x4, offset = 0x4, fixed_abs, tag = 'smem constant byte address 0x4 - core index']
  #allocation1 [shape = 'u32[144,128]{1,0:T(1,128)}', space=vmem, size = 0x12000, scoped, tag = 'internal scratch']
  %s0 = inlined_call_operand.hbm [shape: f32[16,32], index: 0, kind: input, shape index: {}]
  %s1 = inlined_call_operand.hbm [shape: f32[32,384], index: 1, kind: input, shape index: {}]
  %s2 = inlined_call_operand.vmem [shape: f32[1,384], index: 2, kind: input, shape index: {}]
  %s3 = inlined_call_operand.hbm [shape: f32[16,128], index: 3, kind: output, shape index: {}]
  %s4 = sld [smem:[#allocation0]]
  $region30: #{tpu_custom_call.1} parent=0
    _
  %s6 = ssub.s32 1, %s4
  %s7 = scalar_select 0, %s6, %s4
  $region1: #{tpu_custom_call.1} parent=0
    #allocation2 [shape = 'u8[8192]{0}', space=vmem, size = 0x2000, scoped, tag = 'input window, operand 0, single buffered']
    #allocation3 [shape = 's32[1]{0}', space=sflag, size = 0x4, scoped, tag = 'scoped memory for tpu_custom_call.1']
    #allocation4 [shape = 's32[1]{0}', space=sflag, size = 0x4, scoped, tag = 'scoped memory for tpu_custom_call.1']
    #allocation5 [shape = 'u8[49152]{0}', space=vmem, size = 0xc000, scoped, tag = 'input window, operand 1, single buffered']
    #allocation6 [shape = 's32[1]{0}', space=sflag, size = 0x4, scoped, tag = 'scoped memory for tpu_custom_call.1']
    #allocation7 [shape = 'u8[8192]{0}', space=vmem, size = 0x2000, scoped, tag = 'output window, operand 0, single buffered']
    %8 = vsyncpa [#allocation3], 0
    %9 = vsyncpa [#allocation6], 0
    %10 = vsyncpa [#allocation4], 0
    // Predicated region
    $region2: #{tpu_custom_call.1} parent=1 // pred_check
      _
    $region3: #{tpu_custom_call.1} parent=1 // pred_check_branch
      %12 = sbr.rel (0) target = $region5
    $region4: #{tpu_custom_call.1} parent=1 // pred_region
      %s14 = ssub.s32 256, 256
      %15 = vsyncadd [#allocation3], %s14
      %s16 = sshll.u32 [#allocation2], 4
      %s17 = int_to_ptr.vmem [resolvable:$true] %s16
      %22 = dma.hbm_to_vmem [thread:$0]  %s0, 256, %s17, [#allocation3], 128, 128, 8
    $region5: #{tpu_custom_call.1} parent=1 // pred_fallthru
      _
    // Predicated region
    $region6: #{tpu_custom_call.1} parent=1 // pred_check
      _
    $region7: #{tpu_custom_call.1} parent=1 // pred_check_branch
      %24 = sbr.rel (0) target = $region9
    $region8: #{tpu_custom_call.1} parent=1 // pred_region
      %s26 = ssub.s32 1536, 1536
      %27 = vsyncadd [#allocation6], %s26
      %s28 = sshll.u32 [#allocation5], 4
      %s29 = int_to_ptr.vmem [resolvable:$true] %s28
      %34 = dma.hbm_to_vmem [thread:$0]  %s1, 1536, %s29, [#allocation6], 384, 384, 24
    $region9: #{tpu_custom_call.1} parent=1 // pred_fallthru
      _
    // Predicated region
    $region10: #{tpu_custom_call.1} parent=1 // pred_check
      _
    $region11: #{tpu_custom_call.1} parent=1 // pred_check_branch
      %36 = sbr.rel (0) target = $region13
    $region12: #{tpu_custom_call.1} parent=1 // pred_region
      _
    $region13: #{tpu_custom_call.1} parent=1 // pred_fallthru
      _
    // Predicated region
    $region14: #{tpu_custom_call.1} parent=1 // pred_check
      _
    $region15: #{tpu_custom_call.1} parent=1 // pred_check_branch
      %38 = sbr.rel (0) target = $region17
    $region16: #{tpu_custom_call.1} parent=1 // pred_region
      %39 = dma.done [#allocation3], 256
    $region17: #{tpu_custom_call.1} parent=1 // pred_fallthru
      _
    // Predicated region
    $region18: #{tpu_custom_call.1} parent=1 // pred_check
      _
    $region19: #{tpu_custom_call.1} parent=1 // pred_check_branch
      %41 = sbr.rel (0) target = $region21
    $region20: #{tpu_custom_call.1} parent=1 // pred_region
      %42 = dma.done [#allocation6], 1536
    $region21: #{tpu_custom_call.1} parent=1 // pred_fallthru
      _
    %v43 = vld [vmem:[#allocation2] sm:$0xff]
    %v44 = vld [vmem:[#allocation2 + $0x8] sm:$0xff]
    %v45 = vld [vmem:[#allocation5] sm:$0xff]
    %v46 = vld [vmem:[#allocation5 + $0x8] sm:$0xff]
    %v47 = vld [vmem:[#allocation5 + $0x10] sm:$0xff]
    %v48 = vld [vmem:[#allocation5 + $0x18] sm:$0xff]
    %v49 = vld [vmem:[#allocation5 + $0x20] sm:$0xff]
    %v50 = vld [vmem:[#allocation5 + $0x28] sm:$0xff]
    %v51 = vld [vmem:[#allocation5 + $0x30] sm:$0xff]
    %v52 = vld [vmem:[#allocation5 + $0x38] sm:$0xff]
    %v53 = vld [vmem:[#allocation5 + $0x40] sm:$0xff]
    %v54 = vld [vmem:[#allocation5 + $0x48] sm:$0xff]
    %v55 = vld [vmem:[#allocation5 + $0x50] sm:$0xff]
    %v56 = vld [vmem:[#allocation5 + $0x58] sm:$0xff]
    %v57 = vld [vmem:[%s2] sm:$0x7]
    %v59 = vlaneseq
    %v60 = vshrl.u32 %v59, 7
    %v61 = vsub.s32 0, %v60
    %v62 = vrot.slane %v57, %v61
    %v63 = vlaneseq
    %v64 = vshrl.u32 %v63, 7
    %v65 = vsub.s32 1, %v64
    %v66 = vrot.slane %v57, %v65
    %v67 = vlaneseq
    %v68 = vshrl.u32 %v67, 7
    %v69 = vsub.s32 2, %v68
    %v70 = vrot.slane %v57, %v69
    %vm74 = vcmask 261120
    %v76 = vsel %vm74, %v43, 0
    %v79 = vsel %vm74, %v44, 0
    %81 = vmatprep.subr.mxu0 %v46
    %82 = vmatpush1.msra.mxu0 %v45
    %83 = vmatprep.subr.mxu0 %v49
    %84 = vmatpush1.msra.mxu0 %v48
    %85 = vmatprep.subr.mxu0 %v52
    %86 = vmatpush1.msra.mxu0 %v51
    %87 = vmatprep.subr.mxu0 %v55
    %88 = vmatpush1.msra.mxu0 %v54
    %89 = vmatprep.subr.mxu0 0.0
    %90 = vmatpush1.msra.mxu0 0.0
    %91 = vmatprep.subr.mxu0 0.0
    %92 = vmatpush1.msra.mxu0 0.0
    %93 = vmatprep.subr.mxu0 0.0
    %94 = vmatpush1.msra.mxu0 0.0
    %95 = vmatprep.subr.mxu0 0.0
    %96 = vmatpush1.msra.mxu0 0.0
    %97 = vmatprep.subr.mxu0 0.0
    %98 = vmatpush1.msra.mxu0 0.0
    %99 = vmatprep.subr.mxu0 0.0
    %100 = vmatpush1.msra.mxu0 0.0
    %101 = vmatprep.subr.mxu0 0.0
    %102 = vmatpush1.msra.mxu0 0.0
    %103 = vmatprep.subr.mxu0 0.0
    %104 = vmatpush1.msra.mxu0 0.0
    %105 = vmatprep.subr.mxu0 0.0
    %106 = vmatpush1.msra.mxu0 0.0
    %107 = vmatprep.subr.mxu0 0.0
    %108 = vmatpush1.msra.mxu0 0.0
    %109 = vmatprep.subr.mxu0 0.0
    %110 = vmatpush1.msra.mxu0 0.0
    %111 = vmatprep.subr.mxu0 0.0
    %112 = vmatpush1.msra.mxu0 0.0
    %113 = vmatprep.subr.mxu0 0.0
    %114 = vmatpush1.msra.mxu0 0.0
    %115 = vmatprep.subr.mxu0 0.0
    %116 = vmatpush1.msra.mxu0 0.0
    %117 = vmatprep.subr.mxu0 0.0
    %118 = vmatpush1.msra.mxu0 0.0
    %119 = vmatprep.subr.mxu0 0.0
    %120 = vmatpush1.msra.mxu0 0.0
    %121 = vmatprep.subr.mxu0 0.0
    %122 = vmatpush1.msra.mxu0 0.0
    %123 = vmatprep.subr.mxu0 0.0
    %124 = vmatpush1.msra.mxu0 0.0
    %125 = vmatprep.subr.mxu0 0.0
    %126 = vmatpush1.msra.mxu0 0.0
    %127 = vmatprep.subr.mxu0 0.0
    %128 = vmatpush1.msra.mxu0 0.0
    %129 = vmatprep.subr.mxu0 0.0
    %130 = vmatpush1.msra.mxu0 0.0
    %131 = vmatprep.subr.mxu0 0.0
    %132 = vmatpush1.msra.mxu0 0.0
    %133 = vmatprep.subr.mxu0 0.0
    %134 = vmatpush1.msra.mxu0 0.0
    %135 = vmatprep.subr.mxu0 0.0
    %136 = vmatpush1.msra.mxu0 0.0
    %137 = vmatprep.subr.mxu0 0.0
    %138 = vmatpush1.msra.mxu0 0.0
    %139 = vmatprep.subr.mxu0 0.0
    %140 = vmatpush1.msra.mxu0 0.0
    %141 = vmatprep.subr.mxu0 0.0
    %142 = vmatpush1.msra.mxu0 0.0
    %143 = vmatprep.subr.mxu0 0.0
    %144 = vmatpush1.msra.mxu0 0.0
    %145 = vmatprep.mubr.f32.mxu0 0.0
    %146 = vmatmul.mubr.f32.gmra.mrb[0].mxu0 %v76
    %v147 = vpop.f32.mrb[0].mxu0
    %v148 = vadd.f32 %v62, %v147
    %v149 = vpop.f32.mrb[0].mxu0
    %v150 = vadd.f32 %v66, %v149
    %151 = vmatprep.mubr.f32.mxu0 0.0
    %152 = vmatmul.mubr.f32.gmra.mrb[0].mxu0 %v79
    %v153 = vpop.f32.mrb[0].mxu0
    %v154 = vadd.f32 %v62, %v153
    %v155 = vpop.f32.mrb[0].mxu0
    %v156 = vadd.f32 %v66, %v155
    %157 = vdwg.mxu0
    %158 = vmatprep.subr.mxu0 0.0
    %159 = vmatpush1.msra.mxu0 %v47
    %160 = vmatprep.subr.mxu0 0.0
    %161 = vmatpush1.msra.mxu0 %v50
    %162 = vmatprep.subr.mxu0 0.0
    %163 = vmatpush1.msra.mxu0 %v53
    %164 = vmatprep.subr.mxu0 0.0
    %165 = vmatpush1.msra.mxu0 %v56
    %166 = vmatprep.subr.mxu0 0.0
    %167 = vmatpush1.msra.mxu0 0.0
    %168 = vmatprep.subr.mxu0 0.0
    %169 = vmatpush1.msra.mxu0 0.0
    %170 = vmatprep.subr.mxu0 0.0
    %171 = vmatpush1.msra.mxu0 0.0
    %172 = vmatprep.subr.mxu0 0.0
    %173 = vmatpush1.msra.mxu0 0.0
    %174 = vmatprep.subr.mxu0 0.0
    %175 = vmatpush1.msra.mxu0 0.0
    %176 = vmatprep.subr.mxu0 0.0
    %177 = vmatpush1.msra.mxu0 0.0
    %178 = vmatprep.subr.mxu0 0.0
    %179 = vmatpush1.msra.mxu0 0.0
    %180 = vmatprep.subr.mxu0 0.0
    %181 = vmatpush1.msra.mxu0 0.0
    %182 = vmatprep.subr.mxu0 0.0
    %183 = vmatpush1.msra.mxu0 0.0
    %184 = vmatprep.subr.mxu0 0.0
    %185 = vmatpush1.msra.mxu0 0.0
    %186 = vmatprep.subr.mxu0 0.0
    %187 = vmatpush1.msra.mxu0 0.0
    %188 = vmatprep.subr.mxu0 0.0
    %189 = vmatpush1.msra.mxu0 0.0
    %190 = vmatprep.subr.mxu0 0.0
    %191 = vmatpush1.msra.mxu0 0.0
    %192 = vmatprep.subr.mxu0 0.0
    %193 = vmatpush1.msra.mxu0 0.0
    %194 = vmatprep.subr.mxu0 0.0
    %195 = vmatpush1.msra.mxu0 0.0
    %196 = vmatprep.subr.mxu0 0.0
    %197 = vmatpush1.msra.mxu0 0.0
    %198 = vmatprep.subr.mxu0 0.0
    %199 = vmatpush1.msra.mxu0 0.0
    %200 = vmatprep.subr.mxu0 0.0
    %201 = vmatpush1.msra.mxu0 0.0
    %202 = vmatprep.subr.mxu0 0.0
    %203 = vmatpush1.msra.mxu0 0.0
    %204 = vmatprep.subr.mxu0 0.0
    %205 = vmatpush1.msra.mxu0 0.0
    %206 = vmatprep.subr.mxu0 0.0
    %207 = vmatpush1.msra.mxu0 0.0
    %208 = vmatprep.subr.mxu0 0.0
    %209 = vmatpush1.msra.mxu0 0.0
    %210 = vmatprep.subr.mxu0 0.0
    %211 = vmatpush1.msra.mxu0 0.0
    %212 = vmatprep.subr.mxu0 0.0
    %213 = vmatpush1.msra.mxu0 0.0
    %214 = vmatprep.subr.mxu0 0.0
    %215 = vmatpush1.msra.mxu0 0.0
    %216 = vmatprep.subr.mxu0 0.0
    %217 = vmatpush1.msra.mxu0 0.0
    %218 = vmatprep.subr.mxu0 0.0
    %219 = vmatpush1.msra.mxu0 0.0
    %220 = vmatprep.subr.mxu0 0.0
    %221 = vmatpush1.msra.mxu0 0.0
    %222 = vmatprep.mubr.f32.mxu0 0.0
    %223 = vmatmul.mubr.f32.gmra.mrb[0].mxu0 %v76
    %v224 = vpop.f32.mrb[0].mxu0
    %v225 = vadd.f32 %v70, %v224
    %v226 = vpop.f32.mrb[0].mxu0
    %227 = vmatprep.mubr.f32.mxu0 0.0
    %228 = vmatmul.mubr.f32.gmra.mrb[0].mxu0 %v79
    %v229 = vpop.f32.mrb[0].mxu0
    %v230 = vadd.f32 %v70, %v229
    %v231 = vpop.f32.mrb[0].mxu0
    %232 = vdwg.mxu0
    %233 = vmatprep.subr.mxu0 0.0
    %234 = vmatpush1.xpose.msra.mxu0 %v150
    %235 = vmatprep.subr.mxu0 0.0
    %236 = vmatpush1.xpose.msra.mxu0 0.0
    %237 = vmatprep.subr.mxu0 0.0
    %238 = vmatpush1.xpose.msra.mxu0 0.0
    %239 = vmatprep.subr.mxu0 0.0
    %240 = vmatpush1.xpose.msra.mxu0 0.0
    %241 = vmatprep.subr.mxu0 0.0
    %242 = vmatpush1.xpose.msra.mxu0 0.0
    %243 = vmatprep.subr.mxu0 0.0
    %244 = vmatpush1.xpose.msra.mxu0 0.0
    %245 = vmatprep.subr.mxu0 0.0
    %246 = vmatpush1.xpose.msra.mxu0 0.0
    %247 = vmatprep.subr.mxu0 0.0
    %248 = vmatpush1.xpose.msra.mxu0 0.0
    %249 = vmatprep.subr.mxu0 0.0
    %250 = vmatpush1.xpose.msra.mxu0 0.0
    %251 = vmatprep.subr.mxu0 0.0
    %252 = vmatpush1.xpose.msra.mxu0 0.0
    %253 = vmatprep.subr.mxu0 0.0
    %254 = vmatpush1.xpose.msra.mxu0 0.0
    %255 = vmatprep.subr.mxu0 0.0
    %256 = vmatpush1.xpose.msra.mxu0 0.0
    %257 = vmatprep.subr.mxu0 0.0
    %258 = vmatpush1.xpose.msra.mxu0 0.0
    %259 = vmatprep.subr.mxu0 0.0
    %260 = vmatpush1.xpose.msra.mxu0 0.0
    %261 = vmatprep.subr.mxu0 0.0
    %262 = vmatpush1.xpose.msra.mxu0 0.0
    %263 = vmatprep.subr.mxu0 0.0
    %264 = vmatpush1.xpose.msra.mxu0 0.0
    %265 = vmatprep.subr.mxu0 0.0
    %266 = vmatpush1.xpose.msra.mxu0 0.0
    %267 = vmatprep.subr.mxu0 0.0
    %268 = vmatpush1.xpose.msra.mxu0 0.0
    %269 = vmatprep.subr.mxu0 0.0
    %270 = vmatpush1.xpose.msra.mxu0 0.0
    %271 = vmatprep.subr.mxu0 0.0
    %272 = vmatpush1.xpose.msra.mxu0 0.0
    %273 = vmatprep.subr.mxu0 0.0
    %274 = vmatpush1.xpose.msra.mxu0 0.0
    %275 = vmatprep.subr.mxu0 0.0
    %276 = vmatpush1.xpose.msra.mxu0 0.0
    %277 = vmatprep.subr.mxu0 0.0
    %278 = vmatpush1.xpose.msra.mxu0 0.0
    %279 = vmatprep.subr.mxu0 0.0
    %280 = vmatpush1.xpose.msra.mxu0 0.0
    %281 = vmatprep.subr.mxu0 0.0
    %282 = vmatpush1.xpose.msra.mxu0 0.0
    %283 = vmatprep.subr.mxu0 0.0
    %284 = vmatpush1.xpose.msra.mxu0 0.0
    %285 = vmatprep.subr.mxu0 0.0
    %286 = vmatpush1.xpose.msra.mxu0 0.0
    %287 = vmatprep.subr.mxu0 0.0
    %288 = vmatpush1.xpose.msra.mxu0 0.0
    %289 = vmatprep.subr.mxu0 0.0
    %290 = vmatpush1.xpose.msra.mxu0 0.0
    %291 = vmatprep.subr.mxu0 0.0
    %292 = vmatpush1.xpose.msra.mxu0 0.0
    %293 = vmatprep.subr.mxu0 0.0
    %294 = vmatpush1.xpose.msra.mxu0 0.0
    %295 = vmatprep.subr.mxu0 0.0
    %296 = vmatpush1.xpose.msra.mxu0 0.0
    %297 = vmatprep.mubr.f32.mxu0 0.0
    %298 = vmatmul.mubr.f32.gmra.mrb[0].mxu0 %v148
    %v299 = vpop.f32.mrb[0].mxu0
    %v300 = vadd.f32 0.0, %v299
    %v301 = vpop.f32.mrb[0].mxu0
    %302 = vdwg.mxu0
    %vm303 = vcmask 64512
    %v304 = vsel %vm303, %v300, -inf
    %305 = vmax.xlane.f32.xlu0 %v304
    %v306 = vpop.xlane.xlu0 %305
    %v307 = vsub.f32 %v300, %v306
    %v308 = vmul.f32 %v307, 1.442695
    %v309 = vpow.pop %v308
    %v310 = vsel %vm303, %v309, 0.0
    %311 = vadd.xlane.f32.xlu0 %v310
    %v312 = vpop.xlane.xlu0 %311
    %v313 = vrcp.pop %v312
    %v314 = vmul.f32 %v309, %v313
    %v316 = vsel %vm303, %v314, 0
    %318 = vmatprep.subr.mxu0 0.0
    %319 = vmatpush1.msra.mxu0 %v225
    %320 = vmatprep.subr.mxu0 0.0
    %321 = vmatpush1.msra.mxu0 0.0
    %322 = vmatprep.subr.mxu0 0.0
    %323 = vmatpush1.msra.mxu0 0.0
    %324 = vmatprep.subr.mxu0 0.0
    %325 = vmatpush1.msra.mxu0 0.0
    %326 = vmatprep.subr.mxu0 0.0
    %327 = vmatpush1.msra.mxu0 0.0
    %328 = vmatprep.subr.mxu0 0.0
    %329 = vmatpush1.msra.mxu0 0.0
    %330 = vmatprep.subr.mxu0 0.0
    %331 = vmatpush1.msra.mxu0 0.0
    %332 = vmatprep.subr.mxu0 0.0
    %333 = vmatpush1.msra.mxu0 0.0
    %334 = vmatprep.subr.mxu0 0.0
    %335 = vmatpush1.msra.mxu0 0.0
    %336 = vmatprep.subr.mxu0 0.0
    %337 = vmatpush1.msra.mxu0 0.0
    %338 = vmatprep.subr.mxu0 0.0
    %339 = vmatpush1.msra.mxu0 0.0
    %340 = vmatprep.subr.mxu0 0.0
    %341 = vmatpush1.msra.mxu0 0.0
    %342 = vmatprep.subr.mxu0 0.0
    %343 = vmatpush1.msra.mxu0 0.0
    %344 = vmatprep.subr.mxu0 0.0
    %345 = vmatpush1.msra.mxu0 0.0
    %346 = vmatprep.subr.mxu0 0.0
    %347 = vmatpush1.msra.mxu0 0.0
    %348 = vmatprep.subr.mxu0 0.0
    %349 = vmatpush1.msra.mxu0 0.0
    %350 = vmatprep.subr.mxu0 0.0
    %351 = vmatpush1.msra.mxu0 0.0
    %352 = vmatprep.subr.mxu0 0.0
    %353 = vmatpush1.msra.mxu0 0.0
    %354 = vmatprep.subr.mxu0 0.0
    %355 = vmatpush1.msra.mxu0 0.0
    %356 = vmatprep.subr.mxu0 0.0
    %357 = vmatpush1.msra.mxu0 0.0
    %358 = vmatprep.subr.mxu0 0.0
    %359 = vmatpush1.msra.mxu0 0.0
    %360 = vmatprep.subr.mxu0 0.0
    %361 = vmatpush1.msra.mxu0 0.0
    %362 = vmatprep.subr.mxu0 0.0
    %363 = vmatpush1.msra.mxu0 0.0
    %364 = vmatprep.subr.mxu0 0.0
    %365 = vmatpush1.msra.mxu0 0.0
    %366 = vmatprep.subr.mxu0 0.0
    %367 = vmatpush1.msra.mxu0 0.0
    %368 = vmatprep.subr.mxu0 0.0
    %369 = vmatpush1.msra.mxu0 0.0
    %370 = vmatprep.subr.mxu0 0.0
    %371 = vmatpush1.msra.mxu0 0.0
    %372 = vmatprep.subr.mxu0 0.0
    %373 = vmatpush1.msra.mxu0 0.0
    %374 = vmatprep.subr.mxu0 0.0
    %375 = vmatpush1.msra.mxu0 0.0
    %376 = vmatprep.subr.mxu0 0.0
    %377 = vmatpush1.msra.mxu0 0.0
    %378 = vmatprep.subr.mxu0 0.0
    %379 = vmatpush1.msra.mxu0 0.0
    %380 = vmatprep.subr.mxu0 0.0
    %381 = vmatpush1.msra.mxu0 0.0
    %382 = vmatprep.mubr.f32.mxu0 0.0
    %383 = vmatmul.mubr.f32.gmra.mrb[0].mxu0 %v316
    %v384 = vpop.f32.mrb[0].mxu0
    %v385 = vadd.f32 0.0, %v384
    %v386 = vpop.f32.mrb[0].mxu0
    %387 = vdwg.mxu0
    %388 = vst [vmem:[#allocation7] sm:$0xff] %v385
    %389 = vmatprep.subr.mxu0 0.0
    %390 = vmatpush1.xpose.msra.mxu0 %v156
    %391 = vmatprep.subr.mxu0 0.0
    %392 = vmatpush1.xpose.msra.mxu0 0.0
    %393 = vmatprep.subr.mxu0 0.0
    %394 = vmatpush1.xpose.msra.mxu0 0.0
    %395 = vmatprep.subr.mxu0 0.0
    %396 = vmatpush1.xpose.msra.mxu0 0.0
    %397 = vmatprep.subr.mxu0 0.0
    %398 = vmatpush1.xpose.msra.mxu0 0.0
    %399 = vmatprep.subr.mxu0 0.0
    %400 = vmatpush1.xpose.msra.mxu0 0.0
    %401 = vmatprep.subr.mxu0 0.0
    %402 = vmatpush1.xpose.msra.mxu0 0.0
    %403 = vmatprep.subr.mxu0 0.0
    %404 = vmatpush1.xpose.msra.mxu0 0.0
    %405 = vmatprep.subr.mxu0 0.0
    %406 = vmatpush1.xpose.msra.mxu0 0.0
    %407 = vmatprep.subr.mxu0 0.0
    %408 = vmatpush1.xpose.msra.mxu0 0.0
    %409 = vmatprep.subr.mxu0 0.0
    %410 = vmatpush1.xpose.msra.mxu0 0.0
    %411 = vmatprep.subr.mxu0 0.0
    %412 = vmatpush1.xpose.msra.mxu0 0.0
    %413 = vmatprep.subr.mxu0 0.0
    %414 = vmatpush1.xpose.msra.mxu0 0.0
    %415 = vmatprep.subr.mxu0 0.0
    %416 = vmatpush1.xpose.msra.mxu0 0.0
    %417 = vmatprep.subr.mxu0 0.0
    %418 = vmatpush1.xpose.msra.mxu0 0.0
    %419 = vmatprep.subr.mxu0 0.0
    %420 = vmatpush1.xpose.msra.mxu0 0.0
    %421 = vmatprep.subr.mxu0 0.0
    %422 = vmatpush1.xpose.msra.mxu0 0.0
    %423 = vmatprep.subr.mxu0 0.0
    %424 = vmatpush1.xpose.msra.mxu0 0.0
    %425 = vmatprep.subr.mxu0 0.0
    %426 = vmatpush1.xpose.msra.mxu0 0.0
    %427 = vmatprep.subr.mxu0 0.0
    %428 = vmatpush1.xpose.msra.mxu0 0.0
    %429 = vmatprep.subr.mxu0 0.0
    %430 = vmatpush1.xpose.msra.mxu0 0.0
    %431 = vmatprep.subr.mxu0 0.0
    %432 = vmatpush1.xpose.msra.mxu0 0.0
    %433 = vmatprep.subr.mxu0 0.0
    %434 = vmatpush1.xpose.msra.mxu0 0.0
    %435 = vmatprep.subr.mxu0 0.0
    %436 = vmatpush1.xpose.msra.mxu0 0.0
    %437 = vmatprep.subr.mxu0 0.0
    %438 = vmatpush1.xpose.msra.mxu0 0.0
    %439 = vmatprep.subr.mxu0 0.0
    %440 = vmatpush1.xpose.msra.mxu0 0.0
    %441 = vmatprep.subr.mxu0 0.0
    %442 = vmatpush1.xpose.msra.mxu0 0.0
    %443 = vmatprep.subr.mxu0 0.0
    %444 = vmatpush1.xpose.msra.mxu0 0.0
    %445 = vmatprep.subr.mxu0 0.0
    %446 = vmatpush1.xpose.msra.mxu0 0.0
    %447 = vmatprep.subr.mxu0 0.0
    %448 = vmatpush1.xpose.msra.mxu0 0.0
    %449 = vmatprep.subr.mxu0 0.0
    %450 = vmatpush1.xpose.msra.mxu0 0.0
    %451 = vmatprep.subr.mxu0 0.0
    %452 = vmatpush1.xpose.msra.mxu0 0.0
    %453 = vmatprep.mubr.f32.mxu0 0.0
    %454 = vmatmul.mubr.f32.gmra.mrb[0].mxu0 %v154
    %v455 = vpop.f32.mrb[0].mxu0
    %v456 = vadd.f32 0.0, %v455
    %v457 = vpop.f32.mrb[0].mxu0
    %458 = vdwg.mxu0
    %v459 = vsel %vm303, %v456, -inf
    %460 = vmax.xlane.f32.xlu0 %v459
    %v461 = vpop.xlane.xlu0 %460
    %v462 = vsub.f32 %v456, %v461
    %v463 = vmul.f32 %v462, 1.442695
    %v464 = vpow.pop %v463
    %v465 = vsel %vm303, %v464, 0.0
    %466 = vadd.xlane.f32.xlu0 %v465
    %v467 = vpop.xlane.xlu0 %466
    %v468 = vrcp.pop %v467
    %v469 = vmul.f32 %v464, %v468
    %v471 = vsel %vm303, %v469, 0
    %473 = vmatprep.subr.mxu0 0.0
    %474 = vmatpush1.msra.mxu0 %v230
    %475 = vmatprep.subr.mxu0 0.0
    %476 = vmatpush1.msra.mxu0 0.0
    %477 = vmatprep.subr.mxu0 0.0
    %478 = vmatpush1.msra.mxu0 0.0
    %479 = vmatprep.subr.mxu0 0.0
    %480 = vmatpush1.msra.mxu0 0.0
    %481 = vmatprep.subr.mxu0 0.0
    %482 = vmatpush1.msra.mxu0 0.0
    %483 = vmatprep.subr.mxu0 0.0
    %484 = vmatpush1.msra.mxu0 0.0
    %485 = vmatprep.subr.mxu0 0.0
    %486 = vmatpush1.msra.mxu0 0.0
    %487 = vmatprep.subr.mxu0 0.0
    %488 = vmatpush1.msra.mxu0 0.0
    %489 = vmatprep.subr.mxu0 0.0
    %490 = vmatpush1.msra.mxu0 0.0
    %491 = vmatprep.subr.mxu0 0.0
    %492 = vmatpush1.msra.mxu0 0.0
    %493 = vmatprep.subr.mxu0 0.0
    %494 = vmatpush1.msra.mxu0 0.0
    %495 = vmatprep.subr.mxu0 0.0
    %496 = vmatpush1.msra.mxu0 0.0
    %497 = vmatprep.subr.mxu0 0.0
    %498 = vmatpush1.msra.mxu0 0.0
    %499 = vmatprep.subr.mxu0 0.0
    %500 = vmatpush1.msra.mxu0 0.0
    %501 = vmatprep.subr.mxu0 0.0
    %502 = vmatpush1.msra.mxu0 0.0
    %503 = vmatprep.subr.mxu0 0.0
    %504 = vmatpush1.msra.mxu0 0.0
    %505 = vmatprep.subr.mxu0 0.0
    %506 = vmatpush1.msra.mxu0 0.0
    %507 = vmatprep.subr.mxu0 0.0
    %508 = vmatpush1.msra.mxu0 0.0
    %509 = vmatprep.subr.mxu0 0.0
    %510 = vmatpush1.msra.mxu0 0.0
    %511 = vmatprep.subr.mxu0 0.0
    %512 = vmatpush1.msra.mxu0 0.0
    %513 = vmatprep.subr.mxu0 0.0
    %514 = vmatpush1.msra.mxu0 0.0
    %515 = vmatprep.subr.mxu0 0.0
    %516 = vmatpush1.msra.mxu0 0.0
    %517 = vmatprep.subr.mxu0 0.0
    %518 = vmatpush1.msra.mxu0 0.0
    %519 = vmatprep.subr.mxu0 0.0
    %520 = vmatpush1.msra.mxu0 0.0
    %521 = vmatprep.subr.mxu0 0.0
    %522 = vmatpush1.msra.mxu0 0.0
    %523 = vmatprep.subr.mxu0 0.0
    %524 = vmatpush1.msra.mxu0 0.0
    %525 = vmatprep.subr.mxu0 0.0
    %526 = vmatpush1.msra.mxu0 0.0
    %527 = vmatprep.subr.mxu0 0.0
    %528 = vmatpush1.msra.mxu0 0.0
    %529 = vmatprep.subr.mxu0 0.0
    %530 = vmatpush1.msra.mxu0 0.0
    %531 = vmatprep.subr.mxu0 0.0
    %532 = vmatpush1.msra.mxu0 0.0
    %533 = vmatprep.subr.mxu0 0.0
    %534 = vmatpush1.msra.mxu0 0.0
    %535 = vmatprep.subr.mxu0 0.0
    %536 = vmatpush1.msra.mxu0 0.0
    %537 = vmatprep.mubr.f32.mxu0 0.0
    %538 = vmatmul.mubr.f32.gmra.mrb[0].mxu0 %v471
    %v539 = vpop.f32.mrb[0].mxu0
    %v540 = vadd.f32 0.0, %v539
    %v541 = vpop.f32.mrb[0].mxu0
    %542 = vdwg.mxu0
    %543 = vst [vmem:[#allocation7 + $0x8] sm:$0xff] %v540
    // Predicated region
    $region22: #{tpu_custom_call.1} parent=1 // pred_check
      _
    $region23: #{tpu_custom_call.1} parent=1 // pred_check_branch
      %545 = sbr.rel (0) target = $region25
    $region24: #{tpu_custom_call.1} parent=1 // pred_region
      %s547 = ssub.s32 256, 256
      %548 = vsyncadd [#allocation4], %s547
      %s549 = sshll.u32 [#allocation7], 4
      %s550 = int_to_ptr.vmem [resolvable:$true] %s549
      %555 = dma.vmem_to_hbm [thread:$0]  %s550, 256, %s3, [#allocation4], 128, 128, 8
    $region25: #{tpu_custom_call.1} parent=1 // pred_fallthru
      _
    // Predicated region
    $region26: #{tpu_custom_call.1} parent=1 // pred_check
      _
    $region27: #{tpu_custom_call.1} parent=1 // pred_check_branch
      %557 = sbr.rel (0) target = $region29
    $region28: #{tpu_custom_call.1} parent=1 // pred_region
      %558 = dma.done [#allocation4], 256
    $region29: #{tpu_custom_call.1} parent=1 // pred_fallthru
      _
    %559 = vsyncpa [#allocation3], 1
    %560 = vsyncpa [#allocation6], 1
    %561 = vsyncpa [#allocation4], 1

</llo_original>
